<compile_context>
chip_gen: v7x
topology: tpu7x:2x2x1
jax: 0.10.0
libtpu: 0.0.40
codegen_flags: <defaults>
</compile_context>

<pallas_src>
from typing import NamedTuple

import jax
import jax.numpy as jnp
from jax.experimental import pallas as pl
from jax.experimental.pallas import tpu as pltpu

_TM_PREF = 512      # batch tile preference
_TN_PREF = 512      # out-feature tile preference
_TK_PREF = 1024     # reduction tile preference
_FAST_PATH_MACS = 1 << 18


def _round_up(x: int, m: int) -> int:
    return ((x + m - 1) // m) * m


def _sublane_align(dtype) -> int:
    # Second-to-last block dim should be a multiple of the sublane packing
    # (8 for f32, 16 for bf16, 32 for 8-bit types).
    return max(8, 32 // jnp.dtype(dtype).itemsize)


def _largest_divisor_tile(padded_dim: int, pref: int, align: int) -> int:
    """Largest tile <= pref that is a multiple of `align` and divides padded_dim."""
    t = min(pref, padded_dim)
    t -= t % align
    t = max(t, align)
    while t > align and padded_dim % t:
        t -= align
    return t


def _positive_transform(weight, w_type: str):
    w = weight.astype(jnp.float32)
    if w_type == "log":
        return jnp.exp(w)
    return jnp.maximum(w, 0.0) + jnp.float32(1e-6)


class PreparedPositiveWeight(NamedTuple):
    w_packed: jax.Array      # (K_pad, N_pad) positive-transformed, transposed, padded
    in_features: int
    out_features: int


def prepare_positive_weight(weight, w_type: str = "log",
                            compute_dtype=jnp.bfloat16) -> PreparedPositiveWeight:
    """One fused XLA pass: positive transform + transpose + pad + cast.

    Cache the result when the weight is static (inference) to remove this pass
    from the per-call path entirely.
    """
    assert w_type in ("log", "relu")
    n, k = weight.shape
    w_pos_t = _positive_transform(weight, w_type).T          # (K, N)
    k_pad, n_pad = _round_up(k, 128), _round_up(n, 128)
    if (k, n) != (k_pad, n_pad):
        # Zero padding: padded K rows multiply zero-padded x columns, padded N
        # columns produce zeros that are sliced off after the kernel.
        w_pos_t = jnp.pad(w_pos_t, ((0, k_pad - k), (0, n_pad - n)))
    return PreparedPositiveWeight(w_pos_t.astype(compute_dtype), k, n)


def _matmul_kernel(x_ref, w_ref, o_ref):
    # x_ref: (tm, tk), w_ref: (tk, tn), o_ref: (tm, tn) f32 accumulator block
    # resident across the K grid axis (its index_map ignores k).
    @pl.when(pl.program_id(2) == 0)
    def _():
        o_ref[...] = jnp.zeros_like(o_ref)

    o_ref[...] += jnp.dot(x_ref[...], w_ref[...],
                          preferred_element_type=jnp.float32)


def positive_linear_prepared(x, prepared: PreparedPositiveWeight):
    """x: (..., in_features); prepared: output of prepare_positive_weight."""
    *lead, k = x.shape
    assert k == prepared.in_features
    x2d = x.reshape(-1, k)
    b = x2d.shape[0]
    k_pad, n_pad = prepared.w_packed.shape
    compute_dtype = prepared.w_packed.dtype

    b_align = _sublane_align(compute_dtype)
    b_pad = _round_up(max(b, b_align), b_align)
    tm = _largest_divisor_tile(b_pad, _TM_PREF, b_align)
    tn = _largest_divisor_tile(n_pad, _TN_PREF, 128)
    tk = _largest_divisor_tile(k_pad, _TK_PREF, 128)

    x_p = x2d
    if (b, k) != (b_pad, k_pad):
        # Zero-padded K columns contribute nothing; padded rows sliced off below.
        x_p = jnp.pad(x2d, ((0, b_pad - b), (0, k_pad - k)))
    x_p = x_p.astype(compute_dtype)

    # N-tiles outermost so megacore (v7x) splits along N -> disjoint weight
    # panels per TensorCore; K innermost (reduction) with a resident output.
    grid = (n_pad // tn, b_pad // tm, k_pad // tk)

    out_p = pl.pallas_call(
        _matmul_kernel,
        out_shape=jax.ShapeDtypeStruct((b_pad, n_pad), jnp.float32),
        grid_spec=pltpu.PrefetchScalarGridSpec(
            num_scalar_prefetch=0,
            grid=grid,
            in_specs=[
                pl.BlockSpec((tm, tk), lambda j, i, kk: (i, kk)),   # x tile
                pl.BlockSpec((tk, tn), lambda j, i, kk: (kk, j)),   # W_pos^T tile
            ],
            out_specs=pl.BlockSpec((tm, tn), lambda j, i, kk: (i, j)),
        ),
        compiler_params=pltpu.CompilerParams(
            dimension_semantics=("parallel", "parallel", "arbitrary"),
        ),
    )(x_p, prepared.w_packed)

    out = out_p[:b, :prepared.out_features].astype(x.dtype)
    return out.reshape(*lead, prepared.out_features)


def positive_linear(x, weight, w_type: str = "log",
                    compute_dtype=jnp.bfloat16, force_kernel: bool = False):
    """PositiveLinear.forward.  x: (..., K); weight: (N, K) in PyTorch layout.

    compute_dtype=jnp.bfloat16 (default) feeds the MXU in bf16 with f32
    accumulation; pass jnp.float32 for a bit-exact f32 path.
    """
    assert w_type in ("log", "relu")
    *lead, k = x.shape
    n, k2 = weight.shape
    assert k == k2
    b = 1
    for d in lead:
        b *= d

    # Small / narrow shapes: padding to (8,128) tiles would be mostly zero MXU
    # work and the pallas_call overhead dwarfs the useful FLOPs -> plain XLA.
    if not force_kernel and (k < 128 or n < 128 or b * k * n < _FAST_PATH_MACS):
        w_pos = _positive_transform(weight, w_type)
        out = jnp.dot(x.reshape(-1, k).astype(jnp.float32), w_pos.T,
                      precision=jax.lax.Precision.HIGHEST,
                      preferred_element_type=jnp.float32)
        return out.astype(x.dtype).reshape(*lead, n)

    prepared = prepare_positive_weight(weight, w_type, compute_dtype)
    return positive_linear_prepared(x, prepared)


def _rel_err(a, b):
    a = a.astype(jnp.float32)
    b = b.astype(jnp.float32)
    return float(jnp.linalg.norm(a - b) / (jnp.linalg.norm(b) + 1e-12))


if __name__ == "__main__":
    key = jax.random.PRNGKey(0)
    ks = jax.random.split(key, 6)
    HIGH = jax.lax.Precision.HIGHEST

    # --- 1) Module-typical small shapes: fast path + forced f32 kernel path --
    B, K, N = 8, 32, 16
    x = jax.random.normal(ks[0], (B, K), dtype=jnp.float32)
    w = 0.1 * jax.random.normal(ks[1], (N, K), dtype=jnp.float32)
    ref_log = jnp.dot(x, jnp.exp(w).T, precision=HIGH)
    ref_relu = jnp.dot(x, (jnp.maximum(w, 0.0) + 1e-6).T, precision=HIGH)

    out = jax.block_until_ready(positive_linear(x, w, "log"))
    assert jnp.allclose(out, ref_log, atol=1e-5, rtol=1e-5)
    out = jax.block_until_ready(positive_linear(x, w, "relu"))
    assert jnp.allclose(out, ref_relu, atol=1e-5, rtol=1e-5)
    out = jax.block_until_ready(
        positive_linear(x, w, "log", compute_dtype=jnp.float32, force_kernel=True))
    assert jnp.allclose(out, ref_log, atol=1e-4, rtol=1e-4)

    # --- 2) Non-power-of-2 K/N: exercises divisor-based tiling (tk=640, tn=384)
    B, K, N = 64, 640, 384
    x = jax.random.normal(ks[2], (B, K), dtype=jnp.float32)
    w = 0.05 * jax.random.normal(ks[3], (N, K), dtype=jnp.float32)
    ref = jnp.dot(x, jnp.exp(w).T, precision=HIGH)
    out_f32 = jax.block_until_ready(
        positive_linear(x, w, "log", compute_dtype=jnp.float32))
    assert _rel_err(out_f32, ref) < 1e-4
    out_bf16 = jax.block_until_ready(positive_linear(x, w, "log"))   # default bf16 MXU
    assert _rel_err(out_bf16, ref) < 2e-2
    ref_r = jnp.dot(x, (jnp.maximum(w, 0.0) + 1e-6).T, precision=HIGH)
    out_r = jax.block_until_ready(
        positive_linear(x, w, "relu", compute_dtype=jnp.float32))
    assert _rel_err(out_r, ref_r) < 1e-4

    # --- 3) Multi-tile grid: 2 N-tiles (parallel axis) x 2 K-steps (reduction),
    #        via the cached prepared-weight path ------------------------------
    B, K, N = 256, 1536, 1024
    x = jax.random.normal(ks[4], (B, K), dtype=jnp.float32)
    w = 0.05 * jax.random.normal(ks[5], (N, K), dtype=jnp.float32)
    ref = jnp.dot(x, jnp.exp(w).T, precision=HIGH)
    prep_f32 = prepare_positive_weight(w, "log", compute_dtype=jnp.float32)
    out = jax.block_until_ready(positive_linear_prepared(x, prep_f32))
    assert _rel_err(out, ref) < 1e-4
    prep_bf16 = prepare_positive_weight(w, "log")                    # default bf16
    out = jax.block_until_ready(positive_linear_prepared(x, prep_bf16))
    assert _rel_err(out, ref) < 2e-2

    print("KERNEL_OK")
</pallas_src>

<mosaic_0001>
module attributes {stable_mosaic.version = 11 : i64} {
  func.func @_matmul_kernel(%arg0: i32, %arg1: i32, %arg2: i32, %arg3: memref<8x128xf32, #tpu.memory_space<vmem>>, %arg4: memref<128x128xf32, #tpu.memory_space<vmem>>, %arg5: memref<8x128xf32, #tpu.memory_space<vmem>>) attributes {dimension_semantics = [#tpu.dimension_semantics<parallel>, #tpu.dimension_semantics<parallel>, #tpu.dimension_semantics<arbitrary>], iteration_bounds = array<i64: 1, 1, 1>, scalar_prefetch = 0 : i64, scratch_operands = 0 : i64, tpu.core_type = #tpu.core_type<tc>, window_params = [{transform_indices = @transform_0, window_bounds = array<i64: 8, 128>}, {transform_indices = @transform_1, window_bounds = array<i64: 128, 128>}, {transform_indices = @transform_2, window_bounds = array<i64: 8, 128>}]} {
    %c0_i32 = arith.constant 0 : i32
    %0 = arith.cmpi eq, %arg2, %c0_i32 : i32
    %1 = arith.extui %0 : i1 to i32
    %c0_i32_0 = arith.constant 0 : i32
    %2 = arith.cmpi ne, %1, %c0_i32_0 : i32
    scf.if %2 {
      %cst_8 = arith.constant 0.000000e+00 : f32
      %9 = vector.broadcast %cst_8 : f32 to vector<8x128xf32>
      %c0_9 = arith.constant 0 : index
      %c0_10 = arith.constant 0 : index
      %10 = vector.load %arg5[%c0_9, %c0_10] : memref<8x128xf32, #tpu.memory_space<vmem>>, vector<8x128xf32>
      tpu.vector_store %arg5[%c0_9, %c0_10], %9 {strides = array<i32>} : memref<8x128xf32, #tpu.memory_space<vmem>>, vector<8x128xf32>,
    } else {
    }
    %c0 = arith.constant 0 : index
    %c0_1 = arith.constant 0 : index
    %3 = vector.load %arg5[%c0, %c0_1] : memref<8x128xf32, #tpu.memory_space<vmem>>, vector<8x128xf32>
    %c0_2 = arith.constant 0 : index
    %c0_3 = arith.constant 0 : index
    %4 = vector.load %arg3[%c0_2, %c0_3] : memref<8x128xf32, #tpu.memory_space<vmem>>, vector<8x128xf32>
    %c0_4 = arith.constant 0 : index
    %c0_5 = arith.constant 0 : index
    %5 = vector.load %arg4[%c0_4, %c0_5] : memref<128x128xf32, #tpu.memory_space<vmem>>, vector<128x128xf32>
    %cst = arith.constant dense<0.000000e+00> : vector<8x128xf32>
    %6 = tpu.matmul %4, %5, %cst {dimension_numbers = #tpu.dot_dimension_numbers<[1], [0], [0], [1], [0, 0, 1, 1], [], []>} : vector<8x128xf32>, vector<128x128xf32>, vector<8x128xf32> -> vector<8x128xf32>
    %7 = arith.addf %3, %6 : vector<8x128xf32>
    %c0_6 = arith.constant 0 : index
    %c0_7 = arith.constant 0 : index
    %8 = vector.load %arg5[%c0_6, %c0_7] : memref<8x128xf32, #tpu.memory_space<vmem>>, vector<8x128xf32>
    tpu.vector_store %arg5[%c0_6, %c0_7], %7 {strides = array<i32>} : memref<8x128xf32, #tpu.memory_space<vmem>>, vector<8x128xf32>,
    return
  }
  func.func @transform_0(%arg0: i32, %arg1: i32, %arg2: i32) -> (i32, i32) {
    %c0_i32 = arith.constant 0 : i32
    return %arg1, %arg2 : i32, i32
  }
  func.func @transform_1(%arg0: i32, %arg1: i32, %arg2: i32) -> (i32, i32) {
    %c0_i32 = arith.constant 0 : i32
    return %arg2, %arg0 : i32, i32
  }
  func.func @transform_2(%arg0: i32, %arg1: i32, %arg2: i32) -> (i32, i32) {
    %c0_i32 = arith.constant 0 : i32
    return %arg1, %arg0 : i32, i32
  }
}

</mosaic_0001>

<llo_original>
// kernel: tpu_custom_call.1
$region0: #{tpu_custom_call.1}
  #allocation0 [shape = 'u32[]', space=smem, size = 0x4, offset = 0x4, fixed_abs, tag = 'smem constant byte address 0x4 - core index']
  #allocation1 [shape = 'u32[144,128]{1,0:T(1,128)}', space=vmem, size = 0x12000, scoped, tag = 'internal scratch']
  %s0 = inlined_call_operand.hbm [shape: f32[8,128], index: 0, kind: input, shape index: {}]
  %s1 = inlined_call_operand.hbm [shape: f32[128,128], index: 1, kind: input, shape index: {}]
  %s2 = inlined_call_operand.hbm [shape: f32[8,128], index: 2, kind: output, shape index: {}]
  %s3 = sld [smem:[#allocation0]]
  $region30: #{tpu_custom_call.1} parent=0
    _
  %s5 = ssub.s32 1, %s3
  %s6 = scalar_select 0, %s5, %s3
  $region1: #{tpu_custom_call.1} parent=0
    #allocation2 [shape = 'u8[4096]{0}', space=vmem, size = 0x1000, scoped, tag = 'input window, operand 0, single buffered']
    #allocation3 [shape = 's32[1]{0}', space=sflag, size = 0x4, scoped, tag = 'scoped memory for tpu_custom_call.1']
    #allocation4 [shape = 's32[1]{0}', space=sflag, size = 0x4, scoped, tag = 'scoped memory for tpu_custom_call.1']
    #allocation5 [shape = 'u8[65536]{0}', space=vmem, size = 0x10000, scoped, tag = 'input window, operand 1, single buffered']
    #allocation6 [shape = 's32[1]{0}', space=sflag, size = 0x4, scoped, tag = 'scoped memory for tpu_custom_call.1']
    #allocation7 [shape = 'u8[4096]{0}', space=vmem, size = 0x1000, scoped, tag = 'output window, operand 0, single buffered']
    %7 = vsyncpa [#allocation3], 0
    %8 = vsyncpa [#allocation6], 0
    %9 = vsyncpa [#allocation4], 0
    // Predicated region
    $region2: #{tpu_custom_call.1} parent=1 // pred_check
      _
    $region3: #{tpu_custom_call.1} parent=1 // pred_check_branch
      %11 = sbr.rel (0) target = $region5
    $region4: #{tpu_custom_call.1} parent=1 // pred_region
      %s13 = ssub.s32 128, 128
      %14 = vsyncadd [#allocation3], %s13
      %s16 = sshll.u32 [#allocation2], 4
      %s17 = int_to_ptr.vmem [resolvable:$true] %s16
      %19 = dma.hbm_to_vmem [thread:$0]  %s0, 128, %s17, [#allocation3]
    $region5: #{tpu_custom_call.1} parent=1 // pred_fallthru
      _
    // Predicated region
    $region6: #{tpu_custom_call.1} parent=1 // pred_check
      _
    $region7: #{tpu_custom_call.1} parent=1 // pred_check_branch
      %21 = sbr.rel (0) target = $region9
    $region8: #{tpu_custom_call.1} parent=1 // pred_region
      %s23 = ssub.s32 2048, 2048
      %24 = vsyncadd [#allocation6], %s23
      %s25 = sshll.u32 [#allocation5], 4
      %s26 = int_to_ptr.vmem [resolvable:$true] %s25
      %31 = dma.hbm_to_vmem [thread:$0]  %s1, 2048, %s26, [#allocation6], 128, 128, 8
    $region9: #{tpu_custom_call.1} parent=1 // pred_fallthru
      _
    // Predicated region
    $region10: #{tpu_custom_call.1} parent=1 // pred_check
      _
    $region11: #{tpu_custom_call.1} parent=1 // pred_check_branch
      %33 = sbr.rel (0) target = $region13
    $region12: #{tpu_custom_call.1} parent=1 // pred_region
      %34 = dma.done [#allocation3], 128
    $region13: #{tpu_custom_call.1} parent=1 // pred_fallthru
      _
    // Predicated region
    $region14: #{tpu_custom_call.1} parent=1 // pred_check
      _
    $region15: #{tpu_custom_call.1} parent=1 // pred_check_branch
      %36 = sbr.rel (0) target = $region17
    $region16: #{tpu_custom_call.1} parent=1 // pred_region
      %37 = dma.done [#allocation6], 2048
    $region17: #{tpu_custom_call.1} parent=1 // pred_fallthru
      _
    %p38 = scmp.eq.s32.totalorder 0, 0
    // Predicated region
    $region18: #{tpu_custom_call.1} parent=1 // pred_check
      %p39 = pneg %p38
    $region19: #{tpu_custom_call.1} parent=1 // pred_check_branch
      %41 = sbr.rel (%p39) target = $region21
    $region20: #{tpu_custom_call.1} parent=1 // pred_region
      %42 = vst [vmem:[#allocation7] sm:$0xff] 0.0
    $region21: #{tpu_custom_call.1} parent=1 // pred_fallthru
      _
    %v43 = vld [vmem:[#allocation7] sm:$0xff]
    %v44 = vld [vmem:[#allocation2] sm:$0xff]
    %v45 = vld [vmem:[#allocation5] sm:$0xff]
    %v46 = vld [vmem:[#allocation5 + $0x8] sm:$0xff]
    %v47 = vld [vmem:[#allocation5 + $0x10] sm:$0xff]
    %v48 = vld [vmem:[#allocation5 + $0x18] sm:$0xff]
    %v49 = vld [vmem:[#allocation5 + $0x20] sm:$0xff]
    %v50 = vld [vmem:[#allocation5 + $0x28] sm:$0xff]
    %v51 = vld [vmem:[#allocation5 + $0x30] sm:$0xff]
    %v52 = vld [vmem:[#allocation5 + $0x38] sm:$0xff]
    %v53 = vld [vmem:[#allocation5 + $0x40] sm:$0xff]
    %v54 = vld [vmem:[#allocation5 + $0x48] sm:$0xff]
    %v55 = vld [vmem:[#allocation5 + $0x50] sm:$0xff]
    %v56 = vld [vmem:[#allocation5 + $0x58] sm:$0xff]
    %v57 = vld [vmem:[#allocation5 + $0x60] sm:$0xff]
    %v58 = vld [vmem:[#allocation5 + $0x68] sm:$0xff]
    %v59 = vld [vmem:[#allocation5 + $0x70] sm:$0xff]
    %v60 = vld [vmem:[#allocation5 + $0x78] sm:$0xff]
    %61 = vmatprep.subr.mxu0 0.0
    %62 = vmatpush1.msra.mxu0 %v45
    %63 = vmatprep.subr.mxu0 0.0
    %64 = vmatpush1.msra.mxu0 %v46
    %65 = vmatprep.subr.mxu0 0.0
    %66 = vmatpush1.msra.mxu0 %v47
    %67 = vmatprep.subr.mxu0 0.0
    %68 = vmatpush1.msra.mxu0 %v48
    %69 = vmatprep.subr.mxu0 0.0
    %70 = vmatpush1.msra.mxu0 %v49
    %71 = vmatprep.subr.mxu0 0.0
    %72 = vmatpush1.msra.mxu0 %v50
    %73 = vmatprep.subr.mxu0 0.0
    %74 = vmatpush1.msra.mxu0 %v51
    %75 = vmatprep.subr.mxu0 0.0
    %76 = vmatpush1.msra.mxu0 %v52
    %77 = vmatprep.subr.mxu0 0.0
    %78 = vmatpush1.msra.mxu0 %v53
    %79 = vmatprep.subr.mxu0 0.0
    %80 = vmatpush1.msra.mxu0 %v54
    %81 = vmatprep.subr.mxu0 0.0
    %82 = vmatpush1.msra.mxu0 %v55
    %83 = vmatprep.subr.mxu0 0.0
    %84 = vmatpush1.msra.mxu0 %v56
    %85 = vmatprep.subr.mxu0 0.0
    %86 = vmatpush1.msra.mxu0 %v57
    %87 = vmatprep.subr.mxu0 0.0
    %88 = vmatpush1.msra.mxu0 %v58
    %89 = vmatprep.subr.mxu0 0.0
    %90 = vmatpush1.msra.mxu0 %v59
    %91 = vmatprep.subr.mxu0 0.0
    %92 = vmatpush1.msra.mxu0 %v60
    %93 = vmatprep.subr.mxu0 0.0
    %94 = vmatpush1.msra.mxu0 0.0
    %95 = vmatprep.subr.mxu0 0.0
    %96 = vmatpush1.msra.mxu0 0.0
    %97 = vmatprep.subr.mxu0 0.0
    %98 = vmatpush1.msra.mxu0 0.0
    %99 = vmatprep.subr.mxu0 0.0
    %100 = vmatpush1.msra.mxu0 0.0
    %101 = vmatprep.subr.mxu0 0.0
    %102 = vmatpush1.msra.mxu0 0.0
    %103 = vmatprep.subr.mxu0 0.0
    %104 = vmatpush1.msra.mxu0 0.0
    %105 = vmatprep.subr.mxu0 0.0
    %106 = vmatpush1.msra.mxu0 0.0
    %107 = vmatprep.subr.mxu0 0.0
    %108 = vmatpush1.msra.mxu0 0.0
    %109 = vmatprep.subr.mxu0 0.0
    %110 = vmatpush1.msra.mxu0 0.0
    %111 = vmatprep.subr.mxu0 0.0
    %112 = vmatpush1.msra.mxu0 0.0
    %113 = vmatprep.subr.mxu0 0.0
    %114 = vmatpush1.msra.mxu0 0.0
    %115 = vmatprep.subr.mxu0 0.0
    %116 = vmatpush1.msra.mxu0 0.0
    %117 = vmatprep.subr.mxu0 0.0
    %118 = vmatpush1.msra.mxu0 0.0
    %119 = vmatprep.subr.mxu0 0.0
    %120 = vmatpush1.msra.mxu0 0.0
    %121 = vmatprep.subr.mxu0 0.0
    %122 = vmatpush1.msra.mxu0 0.0
    %123 = vmatprep.subr.mxu0 0.0
    %124 = vmatpush1.msra.mxu0 0.0
    %125 = vmatprep.mubr.f32.mxu0 0.0
    %126 = vmatmul.mubr.f32.gmra.mrb[0].mxu0 %v44
    %v127 = vpop.f32.mrb[0].mxu0
    %v128 = vadd.f32 0.0, %v127
    %v129 = vpop.f32.mrb[0].mxu0
    %130 = vdwg.mxu0
    %v131 = vadd.f32 %v43, %v128
    %132 = vst [vmem:[#allocation7] sm:$0xff] %v131
    // Predicated region
    $region22: #{tpu_custom_call.1} parent=1 // pred_check
      _
    $region23: #{tpu_custom_call.1} parent=1 // pred_check_branch
      %134 = sbr.rel (0) target = $region25
    $region24: #{tpu_custom_call.1} parent=1 // pred_region
      %s136 = ssub.s32 128, 128
      %137 = vsyncadd [#allocation4], %s136
      %s139 = sshll.u32 [#allocation7], 4
      %s140 = int_to_ptr.vmem [resolvable:$true] %s139
      %142 = dma.vmem_to_hbm [thread:$0]  %s140, 128, %s2, [#allocation4]
    $region25: #{tpu_custom_call.1} parent=1 // pred_fallthru
      _
    // Predicated region
    $region26: #{tpu_custom_call.1} parent=1 // pred_check
      _
    $region27: #{tpu_custom_call.1} parent=1 // pred_check_branch
      %144 = sbr.rel (0) target = $region29
    $region28: #{tpu_custom_call.1} parent=1 // pred_region
      %145 = dma.done [#allocation4], 128
    $region29: #{tpu_custom_call.1} parent=1 // pred_fallthru
      _
    %146 = vsyncpa [#allocation3], 1
    %147 = vsyncpa [#allocation6], 1
    %148 = vsyncpa [#allocation4], 1

</llo_original>
